<compile_context>
chip_gen: v6e
topology: v6e:2x2x1
jax: 0.10.0
libtpu: 0.0.40
codegen_flags: <defaults>
</compile_context>

<pallas_src>
import jax
import jax.numpy as jnp
from jax.experimental import pallas as pl
from jax.experimental.pallas import tpu as pltpu

_LANE = 128
_SUBLANE = 8


def _round_up(x, m):
    return (x + m - 1) // m * m


def _make_digitnet_kernel(num_f_layers: int):
    """Fused MLP kernel.

    Ref order: x, (w0, b0), ..., (w_clf, b_clf), out.
    Sigmoid after each of the first `num_f_layers` linears (self.f), none after clf.
    """
    total_linear = num_f_layers + 1

    def kernel(*refs):
        x_ref = refs[0]
        out_ref = refs[-1]
        param_refs = refs[1:-1]
        assert len(param_refs) == 2 * total_linear

        h = x_ref[...]                         # bf16 (TB, feat_pad)
        for i in range(total_linear):
            w = param_refs[2 * i][...]         # bf16 (in_pad, out_pad)
            b = param_refs[2 * i + 1][...]     # f32  (1, out_pad)
            h32 = jnp.dot(h, w, preferred_element_type=jnp.float32) + b
            if i < num_f_layers:
                h32 = jax.nn.sigmoid(h32)      # keep activation in f32 (v5e-safe)
                h = h32.astype(jnp.bfloat16)   # narrow only the next matmul operand
            else:
                h = h32                        # clf output stays f32
        out_ref[...] = h.astype(out_ref.dtype)

    return kernel


def digitnet_forward(x, params, *, batch_tile=None):
    """x: (batch, n_features). params: list of (W (in,out) f32, b (1,out) f32)."""
    num_f_layers = len(params) - 1
    kernel = _make_digitnet_kernel(num_f_layers)

    batch, n_features = x.shape
    n_classes = params[-1][0].shape[1]

    # --- pad & cast params: lane-dense widths; padded weight ROWS are zero so
    #     padded sigmoid(0)=0.5 activations never leak into the next layer. ---
    padded_params = []
    for (w, b) in params:
        in_dim, out_dim = w.shape
        in_pad = _round_up(in_dim, _LANE)
        out_pad = _round_up(out_dim, _LANE)
        w_p = jnp.zeros((in_pad, out_pad), jnp.float32).at[:in_dim, :out_dim].set(w)
        b_p = jnp.zeros((1, out_pad), jnp.float32).at[:, :out_dim].set(
            jnp.reshape(b, (1, out_dim)))
        padded_params.append((w_p.astype(jnp.bfloat16), b_p))

    feat_pad = _round_up(n_features, _LANE)
    out_pad_last = padded_params[-1][0].shape[1]

    # --- batch tile: multiple of 8 sublanes, up to 256 to fill the MXU M dim ---
    if batch_tile is None:
        batch_tile = min(256, _round_up(batch, _SUBLANE))
    tb = batch_tile
    padded_batch = _round_up(batch, tb)

    # --- pad + narrow the input ---
    x_p = jnp.zeros((padded_batch, feat_pad), jnp.bfloat16)
    x_p = x_p.at[:batch, :n_features].set(x.astype(jnp.bfloat16))

    flat_inputs = [x_p]
    for w, b in padded_params:
        flat_inputs.append(w)
        flat_inputs.append(b)

    grid = (padded_batch // tb,)

    in_specs = [pl.BlockSpec((tb, feat_pad), lambda i: (i, 0))]
    for w, b in padded_params:
        in_specs.append(pl.BlockSpec(w.shape, lambda i: (0, 0)))   # VMEM-resident
        in_specs.append(pl.BlockSpec(b.shape, lambda i: (0, 0)))   # VMEM-resident
    out_spec = pl.BlockSpec((tb, out_pad_last), lambda i: (i, 0))

    flops = 2 * padded_batch * sum(int(w.shape[0]) * int(w.shape[1])
                                   for w, _ in padded_params)
    transcendentals = padded_batch * sum(int(w.shape[1])
                                         for w, _ in padded_params[:num_f_layers])
    bytes_accessed = (
        x_p.size * x_p.dtype.itemsize
        + sum(int(a.size) * a.dtype.itemsize for w, b in padded_params for a in (w, b))
        + padded_batch * out_pad_last * 4)

    out_padded = pl.pallas_call(
        kernel,
        out_shape=jax.ShapeDtypeStruct((padded_batch, out_pad_last), jnp.float32),
        grid=grid,
        in_specs=in_specs,
        out_specs=out_spec,
        compiler_params=pltpu.CompilerParams(
            dimension_semantics=("parallel",),
        ),
        cost_estimate=pl.CostEstimate(
            flops=flops,
            transcendentals=transcendentals,
            bytes_accessed=bytes_accessed,
        ),
    )(*flat_inputs)

    return out_padded[:batch, :n_classes]


def init_digitnet_params(key, layers, n_features, n_classes):
    """Deterministic init matching DigitNet's layer shapes (W stored as (in, out))."""
    layers_in = [n_features] + list(layers)
    layers_out = list(layers) + [n_classes]
    dims = list(zip(layers_in, layers_out)) + [(n_classes, n_classes)]  # + clf

    params = []
    for (fan_in, fan_out) in dims:
        key, kw, kb = jax.random.split(key, 3)
        bound = 1.0 / (fan_in ** 0.5)  # PyTorch nn.Linear default uniform bound
        w = jax.random.uniform(kw, (fan_in, fan_out), jnp.float32, -bound, bound)
        b = jax.random.uniform(kb, (1, fan_out), jnp.float32, -bound, bound)
        params.append((w, b))
    return params


def digitnet_reference(x, params):
    """Plain-JAX f32 reference (matches the PyTorch forward)."""
    h = x
    for i, (w, b) in enumerate(params):
        h = h @ w + b
        if i < len(params) - 1:
            h = jax.nn.sigmoid(h)
    return h


if __name__ == "__main__":
    # DigitNet(layers=[32], n_features=256, n_classes=10), batch=8.
    batch = 8
    n_features = 256
    layers = [32]
    n_classes = 10

    key = jax.random.PRNGKey(0)
    key, kx = jax.random.split(key)
    x = jax.random.normal(kx, (batch, n_features), jnp.float32)

    params = init_digitnet_params(key, layers, n_features, n_classes)

    out = digitnet_forward(x, params)
    out = jax.block_until_ready(out)

    ref = digitnet_reference(x, params)
    assert out.shape == (batch, n_classes)
    # bf16 matmul operands (f32 accumulation) -> loose tolerance vs f32 reference.
    assert jnp.allclose(out, ref, atol=3e-2, rtol=3e-2), "mismatch vs reference"

    print("KERNEL_OK")
</pallas_src>

<mosaic_0001>
module attributes {stable_mosaic.version = 11 : i64} {
  func.func @kernel(%arg0: i32, %arg1: memref<8x256xbf16, #tpu.memory_space<vmem>>, %arg2: memref<256x128xbf16, #tpu.memory_space<vmem>>, %arg3: memref<1x128xf32, #tpu.memory_space<vmem>>, %arg4: memref<128x128xbf16, #tpu.memory_space<vmem>>, %arg5: memref<1x128xf32, #tpu.memory_space<vmem>>, %arg6: memref<128x128xbf16, #tpu.memory_space<vmem>>, %arg7: memref<1x128xf32, #tpu.memory_space<vmem>>, %arg8: memref<8x128xf32, #tpu.memory_space<vmem>>) attributes {dimension_semantics = [#tpu.dimension_semantics<parallel>], iteration_bounds = array<i64: 1>, scalar_prefetch = 0 : i64, scratch_operands = 0 : i64, tpu.core_type = #tpu.core_type<tc>, window_params = [{transform_indices = @transform_0, window_bounds = array<i64: 8, 256>}, {pipeline_mode = #tpu.pipeline_mode<synchronous>, transform_indices = @transform_1, window_bounds = array<i64: 256, 128>}, {pipeline_mode = #tpu.pipeline_mode<synchronous>, transform_indices = @transform_2, window_bounds = array<i64: 1, 128>}, {pipeline_mode = #tpu.pipeline_mode<synchronous>, transform_indices = @transform_3, window_bounds = array<i64: 128, 128>}, {pipeline_mode = #tpu.pipeline_mode<synchronous>, transform_indices = @transform_4, window_bounds = array<i64: 1, 128>}, {pipeline_mode = #tpu.pipeline_mode<synchronous>, transform_indices = @transform_5, window_bounds = array<i64: 128, 128>}, {pipeline_mode = #tpu.pipeline_mode<synchronous>, transform_indices = @transform_6, window_bounds = array<i64: 1, 128>}, {transform_indices = @transform_7, window_bounds = array<i64: 8, 128>}]} {
    %c0 = arith.constant 0 : index
    %c0_0 = arith.constant 0 : index
    %0 = vector.load %arg1[%c0, %c0_0] : memref<8x256xbf16, #tpu.memory_space<vmem>>, vector<8x256xbf16>
    %c0_1 = arith.constant 0 : index
    %c0_2 = arith.constant 0 : index
    %1 = vector.load %arg2[%c0_1, %c0_2] : memref<256x128xbf16, #tpu.memory_space<vmem>>, vector<256x128xbf16>
    %c0_3 = arith.constant 0 : index
    %c0_4 = arith.constant 0 : index
    %2 = vector.load %arg3[%c0_3, %c0_4] : memref<1x128xf32, #tpu.memory_space<vmem>>, vector<1x128xf32>
    %cst = arith.constant dense<0.000000e+00> : vector<8x128xf32>
    %3 = tpu.matmul %0, %1, %cst {dimension_numbers = #tpu.dot_dimension_numbers<[1], [0], [0], [1], [0, 0, 1, 1], [], []>} : vector<8x256xbf16>, vector<256x128xbf16>, vector<8x128xf32> -> vector<8x128xf32>
    %4 = vector.broadcast %2 : vector<1x128xf32> to vector<8x128xf32>
    %5 = arith.addf %3, %4 : vector<8x128xf32>
    %6 = arith.negf %5 : vector<8x128xf32>
    %7 = math.exp %6 : vector<8x128xf32>
    %cst_5 = arith.constant 1.000000e+00 : f32
    %8 = vector.broadcast %cst_5 : f32 to vector<8x128xf32>
    %9 = arith.addf %8, %7 : vector<8x128xf32>
    %10 = arith.divf %8, %9 : vector<8x128xf32>
    %11 = arith.truncf %10 : vector<8x128xf32> to vector<8x128xbf16>
    %c0_6 = arith.constant 0 : index
    %c0_7 = arith.constant 0 : index
    %12 = vector.load %arg4[%c0_6, %c0_7] : memref<128x128xbf16, #tpu.memory_space<vmem>>, vector<128x128xbf16>
    %c0_8 = arith.constant 0 : index
    %c0_9 = arith.constant 0 : index
    %13 = vector.load %arg5[%c0_8, %c0_9] : memref<1x128xf32, #tpu.memory_space<vmem>>, vector<1x128xf32>
    %cst_10 = arith.constant dense<0.000000e+00> : vector<8x128xf32>
    %14 = tpu.matmul %11, %12, %cst_10 {dimension_numbers = #tpu.dot_dimension_numbers<[1], [0], [0], [1], [0, 0, 1, 1], [], []>} : vector<8x128xbf16>, vector<128x128xbf16>, vector<8x128xf32> -> vector<8x128xf32>
    %15 = vector.broadcast %13 : vector<1x128xf32> to vector<8x128xf32>
    %16 = arith.addf %14, %15 : vector<8x128xf32>
    %17 = arith.negf %16 : vector<8x128xf32>
    %18 = math.exp %17 : vector<8x128xf32>
    %cst_11 = arith.constant 1.000000e+00 : f32
    %19 = vector.broadcast %cst_11 : f32 to vector<8x128xf32>
    %20 = arith.addf %19, %18 : vector<8x128xf32>
    %21 = arith.divf %19, %20 : vector<8x128xf32>
    %22 = arith.truncf %21 : vector<8x128xf32> to vector<8x128xbf16>
    %c0_12 = arith.constant 0 : index
    %c0_13 = arith.constant 0 : index
    %23 = vector.load %arg6[%c0_12, %c0_13] : memref<128x128xbf16, #tpu.memory_space<vmem>>, vector<128x128xbf16>
    %c0_14 = arith.constant 0 : index
    %c0_15 = arith.constant 0 : index
    %24 = vector.load %arg7[%c0_14, %c0_15] : memref<1x128xf32, #tpu.memory_space<vmem>>, vector<1x128xf32>
    %cst_16 = arith.constant dense<0.000000e+00> : vector<8x128xf32>
    %25 = tpu.matmul %22, %23, %cst_16 {dimension_numbers = #tpu.dot_dimension_numbers<[1], [0], [0], [1], [0, 0, 1, 1], [], []>} : vector<8x128xbf16>, vector<128x128xbf16>, vector<8x128xf32> -> vector<8x128xf32>
    %26 = vector.broadcast %24 : vector<1x128xf32> to vector<8x128xf32>
    %27 = arith.addf %25, %26 : vector<8x128xf32>
    %c0_17 = arith.constant 0 : index
    %c0_18 = arith.constant 0 : index
    %28 = vector.load %arg8[%c0_17, %c0_18] : memref<8x128xf32, #tpu.memory_space<vmem>>, vector<8x128xf32>
    tpu.vector_store %arg8[%c0_17, %c0_18], %27 {strides = array<i32>} : memref<8x128xf32, #tpu.memory_space<vmem>>, vector<8x128xf32>,
    return
  }
  func.func @transform_0(%arg0: i32) -> (i32, i32) {
    %c0_i32 = arith.constant 0 : i32
    %c0_i32_0 = arith.constant 0 : i32
    return %arg0, %c0_i32 : i32, i32
  }
  func.func @transform_1(%arg0: i32) -> (i32, i32) {
    %c0_i32 = arith.constant 0 : i32
    %c0_i32_0 = arith.constant 0 : i32
    %c0_i32_1 = arith.constant 0 : i32
    return %c0_i32, %c0_i32_0 : i32, i32
  }
  func.func @transform_2(%arg0: i32) -> (i32, i32) {
    %c0_i32 = arith.constant 0 : i32
    %c0_i32_0 = arith.constant 0 : i32
    %c0_i32_1 = arith.constant 0 : i32
    return %c0_i32, %c0_i32_0 : i32, i32
  }
  func.func @transform_3(%arg0: i32) -> (i32, i32) {
    %c0_i32 = arith.constant 0 : i32
    %c0_i32_0 = arith.constant 0 : i32
    %c0_i32_1 = arith.constant 0 : i32
    return %c0_i32, %c0_i32_0 : i32, i32
  }
  func.func @transform_4(%arg0: i32) -> (i32, i32) {
    %c0_i32 = arith.constant 0 : i32
    %c0_i32_0 = arith.constant 0 : i32
    %c0_i32_1 = arith.constant 0 : i32
    return %c0_i32, %c0_i32_0 : i32, i32
  }
  func.func @transform_5(%arg0: i32) -> (i32, i32) {
    %c0_i32 = arith.constant 0 : i32
    %c0_i32_0 = arith.constant 0 : i32
    %c0_i32_1 = arith.constant 0 : i32
    return %c0_i32, %c0_i32_0 : i32, i32
  }
  func.func @transform_6(%arg0: i32) -> (i32, i32) {
    %c0_i32 = arith.constant 0 : i32
    %c0_i32_0 = arith.constant 0 : i32
    %c0_i32_1 = arith.constant 0 : i32
    return %c0_i32, %c0_i32_0 : i32, i32
  }
  func.func @transform_7(%arg0: i32) -> (i32, i32) {
    %c0_i32 = arith.constant 0 : i32
    %c0_i32_0 = arith.constant 0 : i32
    return %arg0, %c0_i32 : i32, i32
  }
}

</mosaic_0001>

<llo_original>
// kernel: tpu_custom_call.1
$region0: #{tpu_custom_call.1}
  #allocation0 [shape = 'u32[]', space=smem, size = 0x4, offset = 0x4, fixed_abs, tag = 'smem constant byte address 0x4 - core index']
  #allocation1 [shape = 'u32[144,128]{1,0:T(1,128)}', space=vmem, size = 0x12000, scoped, tag = 'internal scratch']
  %s0 = inlined_call_operand.hbm [shape: bf16[8,256], index: 0, kind: input, shape index: {}]
  %s1 = inlined_call_operand.hbm [shape: bf16[256,128], index: 1, kind: input, shape index: {}]
  %s2 = inlined_call_operand.vmem [shape: f32[1,128], index: 2, kind: input, shape index: {}]
  %s3 = inlined_call_operand.hbm [shape: bf16[128,128], index: 3, kind: input, shape index: {}]
  %s4 = inlined_call_operand.vmem [shape: f32[1,128], index: 4, kind: input, shape index: {}]
  %s5 = inlined_call_operand.hbm [shape: bf16[128,128], index: 5, kind: input, shape index: {}]
  %s6 = inlined_call_operand.vmem [shape: f32[1,128], index: 6, kind: input, shape index: {}]
  %s7 = inlined_call_operand.hbm [shape: f32[8,128], index: 7, kind: output, shape index: {}]
  %s8 = sld [smem:[#allocation0]]
  $region54: #{tpu_custom_call.1} parent=0
    _
  %s10 = ssub.s32 1, %s8
  %s11 = scalar_select 0, %s10, %s8
  $region1: #{tpu_custom_call.1} parent=0
    #allocation2 [shape = 'u8[4096]{0}', space=vmem, size = 0x1000, scoped, tag = 'input window, operand 0, single buffered']
    #allocation3 [shape = 's32[1]{0}', space=sflag, size = 0x4, scoped, tag = 'scoped memory for tpu_custom_call.1']
    #allocation4 [shape = 's32[1]{0}', space=sflag, size = 0x4, scoped, tag = 'scoped memory for tpu_custom_call.1']
    #allocation5 [shape = 'u8[65536]{0}', space=vmem, size = 0x10000, scoped, tag = 'input window, operand 1, single buffered']
    #allocation6 [shape = 's32[1]{0}', space=sflag, size = 0x4, scoped, tag = 'scoped memory for tpu_custom_call.1']
    #allocation7 [shape = 'u8[32768]{0}', space=vmem, size = 0x8000, scoped, tag = 'input window, operand 3, single buffered']
    #allocation8 [shape = 'u8[32768]{0}', space=vmem, size = 0x8000, scoped, tag = 'input window, operand 5, single buffered']
    #allocation9 [shape = 's32[1]{0}', space=sflag, size = 0x4, scoped, tag = 'scoped memory for tpu_custom_call.1']
    #allocation10 [shape = 'u8[4096]{0}', space=vmem, size = 0x1000, scoped, tag = 'output window, operand 0, single buffered']
    %12 = vsyncpa [#allocation3], 0
    %13 = vsyncpa [#allocation6], 0
    %14 = vsyncpa [#allocation9], 0
    %15 = vsyncpa [#allocation4], 0
    // Predicated region
    $region2: #{tpu_custom_call.1} parent=1 // pred_check
      _
    $region3: #{tpu_custom_call.1} parent=1 // pred_check_branch
      %17 = sbr.rel (0) target = $region5
    $region4: #{tpu_custom_call.1} parent=1 // pred_region
      %s19 = ssub.s32 128, 128
      %20 = vsyncadd [#allocation3], %s19
      %s22 = sshll.u32 [#allocation2], 4
      %s23 = int_to_ptr.vmem [resolvable:$true] %s22
      %25 = dma.hbm_to_vmem [thread:$0]  %s0, 128, %s23, [#allocation3]
    $region5: #{tpu_custom_call.1} parent=1 // pred_fallthru
      _
    // Predicated region
    $region6: #{tpu_custom_call.1} parent=1 // pred_check
      _
    $region7: #{tpu_custom_call.1} parent=1 // pred_check_branch
      %27 = sbr.rel (0) target = $region9
    $region8: #{tpu_custom_call.1} parent=1 // pred_region
      %s29 = ssub.s32 2048, 2048
      %30 = vsyncadd [#allocation6], %s29
      %s31 = sshll.u32 [#allocation5], 4
      %s32 = int_to_ptr.vmem [resolvable:$true] %s31
      %37 = dma.hbm_to_vmem [thread:$0]  %s1, 2048, %s32, [#allocation6], 64, 64, 4
    $region9: #{tpu_custom_call.1} parent=1 // pred_fallthru
      _
    // Predicated region
    $region10: #{tpu_custom_call.1} parent=1 // pred_check
      _
    $region11: #{tpu_custom_call.1} parent=1 // pred_check_branch
      %39 = sbr.rel (0) target = $region13
    $region12: #{tpu_custom_call.1} parent=1 // pred_region
      _
    $region13: #{tpu_custom_call.1} parent=1 // pred_fallthru
      _
    // Predicated region
    $region14: #{tpu_custom_call.1} parent=1 // pred_check
      _
    $region15: #{tpu_custom_call.1} parent=1 // pred_check_branch
      %41 = sbr.rel (0) target = $region17
    $region16: #{tpu_custom_call.1} parent=1 // pred_region
      %s43 = ssub.s32 1024, 1024
      %44 = vsyncadd [#allocation6], %s43
      %s45 = sshll.u32 [#allocation7], 4
      %s46 = int_to_ptr.vmem [resolvable:$true] %s45
      %51 = dma.hbm_to_vmem [thread:$0]  %s3, 1024, %s46, [#allocation6], 64, 64, 4
    $region17: #{tpu_custom_call.1} parent=1 // pred_fallthru
      _
    // Predicated region
    $region18: #{tpu_custom_call.1} parent=1 // pred_check
      _
    $region19: #{tpu_custom_call.1} parent=1 // pred_check_branch
      %53 = sbr.rel (0) target = $region21
    $region20: #{tpu_custom_call.1} parent=1 // pred_region
      _
    $region21: #{tpu_custom_call.1} parent=1 // pred_fallthru
      _
    // Predicated region
    $region22: #{tpu_custom_call.1} parent=1 // pred_check
      _
    $region23: #{tpu_custom_call.1} parent=1 // pred_check_branch
      %55 = sbr.rel (0) target = $region25
    $region24: #{tpu_custom_call.1} parent=1 // pred_region
      %s57 = ssub.s32 1024, 1024
      %58 = vsyncadd [#allocation9], %s57
      %s59 = sshll.u32 [#allocation8], 4
      %s60 = int_to_ptr.vmem [resolvable:$true] %s59
      %65 = dma.hbm_to_vmem [thread:$0]  %s5, 1024, %s60, [#allocation9], 64, 64, 4
    $region25: #{tpu_custom_call.1} parent=1 // pred_fallthru
      _
    // Predicated region
    $region26: #{tpu_custom_call.1} parent=1 // pred_check
      _
    $region27: #{tpu_custom_call.1} parent=1 // pred_check_branch
      %67 = sbr.rel (0) target = $region29
    $region28: #{tpu_custom_call.1} parent=1 // pred_region
      _
    $region29: #{tpu_custom_call.1} parent=1 // pred_fallthru
      _
    // Predicated region
    $region30: #{tpu_custom_call.1} parent=1 // pred_check
      _
    $region31: #{tpu_custom_call.1} parent=1 // pred_check_branch
      %69 = sbr.rel (0) target = $region33
    $region32: #{tpu_custom_call.1} parent=1 // pred_region
      %70 = dma.done [#allocation3], 128
    $region33: #{tpu_custom_call.1} parent=1 // pred_fallthru
      _
    // Predicated region
    $region34: #{tpu_custom_call.1} parent=1 // pred_check
      _
    $region35: #{tpu_custom_call.1} parent=1 // pred_check_branch
      %72 = sbr.rel (0) target = $region37
    $region36: #{tpu_custom_call.1} parent=1 // pred_region
      %73 = dma.done [#allocation6], 2048
    $region37: #{tpu_custom_call.1} parent=1 // pred_fallthru
      _
    // Predicated region
    $region38: #{tpu_custom_call.1} parent=1 // pred_check
      _
    $region39: #{tpu_custom_call.1} parent=1 // pred_check_branch
      %75 = sbr.rel (0) target = $region41
    $region40: #{tpu_custom_call.1} parent=1 // pred_region
      %76 = dma.done [#allocation6], 1024
    $region41: #{tpu_custom_call.1} parent=1 // pred_fallthru
      _
    // Predicated region
    $region42: #{tpu_custom_call.1} parent=1 // pred_check
      _
    $region43: #{tpu_custom_call.1} parent=1 // pred_check_branch
      %78 = sbr.rel (0) target = $region45
    $region44: #{tpu_custom_call.1} parent=1 // pred_region
      %79 = dma.done [#allocation9], 1024
    $region45: #{tpu_custom_call.1} parent=1 // pred_fallthru
      _
    %v81 = vld [vmem:[#allocation2] sm:$0xff]
    %v82 = vld [vmem:[#allocation5] sm:$0xf]
    %v83 = vld [vmem:[#allocation5 + $0x4] sm:$0xf]
    %v84 = vld [vmem:[#allocation5 + $0x8] sm:$0xf]
    %v85 = vld [vmem:[#allocation5 + $0xc] sm:$0xf]
    %v86 = vld [vmem:[#allocation5 + $0x10] sm:$0xf]
    %v87 = vld [vmem:[#allocation5 + $0x14] sm:$0xf]
    %v88 = vld [vmem:[#allocation5 + $0x18] sm:$0xf]
    %v89 = vld [vmem:[#allocation5 + $0x1c] sm:$0xf]
    %v90 = vld [vmem:[#allocation5 + $0x20] sm:$0xf]
    %v91 = vld [vmem:[#allocation5 + $0x24] sm:$0xf]
    %v92 = vld [vmem:[#allocation5 + $0x28] sm:$0xf]
    %v93 = vld [vmem:[#allocation5 + $0x2c] sm:$0xf]
    %v94 = vld [vmem:[#allocation5 + $0x30] sm:$0xf]
    %v95 = vld [vmem:[#allocation5 + $0x34] sm:$0xf]
    %v96 = vld [vmem:[#allocation5 + $0x38] sm:$0xf]
    %v97 = vld [vmem:[#allocation5 + $0x3c] sm:$0xf]
    %v98 = vld [vmem:[#allocation5 + $0x40] sm:$0xf]
    %v99 = vld [vmem:[#allocation5 + $0x44] sm:$0xf]
    %v100 = vld [vmem:[#allocation5 + $0x48] sm:$0xf]
    %v101 = vld [vmem:[#allocation5 + $0x4c] sm:$0xf]
    %v102 = vld [vmem:[#allocation5 + $0x50] sm:$0xf]
    %v103 = vld [vmem:[#allocation5 + $0x54] sm:$0xf]
    %v104 = vld [vmem:[#allocation5 + $0x58] sm:$0xf]
    %v105 = vld [vmem:[#allocation5 + $0x5c] sm:$0xf]
    %v106 = vld [vmem:[#allocation5 + $0x60] sm:$0xf]
    %v107 = vld [vmem:[#allocation5 + $0x64] sm:$0xf]
    %v108 = vld [vmem:[#allocation5 + $0x68] sm:$0xf]
    %v109 = vld [vmem:[#allocation5 + $0x6c] sm:$0xf]
    %v110 = vld [vmem:[#allocation5 + $0x70] sm:$0xf]
    %v111 = vld [vmem:[#allocation5 + $0x74] sm:$0xf]
    %v112 = vld [vmem:[#allocation5 + $0x78] sm:$0xf]
    %v113 = vld [vmem:[#allocation5 + $0x7c] sm:$0xf]
    %v114 = vld [vmem:[%s2] sm:$0x1]
    %v116 = vlaneseq
    %v117 = vshrl.u32 %v116, 7
    %v118 = vsub.s32 0, %v117
    %v119 = vrot.slane %v114, %v118
    %v122 = vunpack.c.l.b16 %v81
    %v123 = vunpack.c.h.b16 %v81
    %v124 = vpack.c.b16 %v122, %v122
    %v125 = vpack.c.b16 %v123, %v123
    %v160 = vunpack.c.l.b16 %v82
    %v161 = vunpack.c.l.b16 %v83
    %v162 = vunpack.c.l.b16 %v84
    %v163 = vunpack.c.l.b16 %v85
    %v164 = vunpack.c.l.b16 %v86
    %v165 = vunpack.c.l.b16 %v87
    %v166 = vunpack.c.l.b16 %v88
    %v167 = vunpack.c.l.b16 %v89
    %v168 = vunpack.c.l.b16 %v90
    %v169 = vunpack.c.l.b16 %v91
    %v170 = vunpack.c.l.b16 %v92
    %v171 = vunpack.c.l.b16 %v93
    %v172 = vunpack.c.l.b16 %v94
    %v173 = vunpack.c.l.b16 %v95
    %v174 = vunpack.c.l.b16 %v96
    %v175 = vunpack.c.l.b16 %v97
    %v176 = vunpack.c.l.b16 %v98
    %v177 = vunpack.c.l.b16 %v99
    %v178 = vunpack.c.l.b16 %v100
    %v179 = vunpack.c.l.b16 %v101
    %v180 = vunpack.c.l.b16 %v102
    %v181 = vunpack.c.l.b16 %v103
    %v182 = vunpack.c.l.b16 %v104
    %v183 = vunpack.c.l.b16 %v105
    %v184 = vunpack.c.l.b16 %v106
    %v185 = vunpack.c.l.b16 %v107
    %v186 = vunpack.c.l.b16 %v108
    %v187 = vunpack.c.l.b16 %v109
    %v188 = vunpack.c.l.b16 %v110
    %v189 = vunpack.c.l.b16 %v111
    %v190 = vunpack.c.l.b16 %v112
    %v191 = vunpack.c.l.b16 %v113
    %v192 = vpack.c.b16 %v161, %v160
    %v193 = vpack.c.b16 %v163, %v162
    %v194 = vpack.c.b16 %v165, %v164
    %v195 = vpack.c.b16 %v167, %v166
    %v196 = vpack.c.b16 %v169, %v168
    %v197 = vpack.c.b16 %v171, %v170
    %v198 = vpack.c.b16 %v173, %v172
    %v199 = vpack.c.b16 %v175, %v174
    %v200 = vpack.c.b16 %v177, %v176
    %v201 = vpack.c.b16 %v179, %v178
    %v202 = vpack.c.b16 %v181, %v180
    %v203 = vpack.c.b16 %v183, %v182
    %v204 = vpack.c.b16 %v185, %v184
    %v205 = vpack.c.b16 %v187, %v186
    %v206 = vpack.c.b16 %v189, %v188
    %v207 = vpack.c.b16 %v191, %v190
    %224 = vmatprep.subr.bf16.mxu0 0
    %225 = vmatpush1.bf16.msra.mxu0 %v199
    %226 = vmatprep.subr.bf16.mxu0 0
    %227 = vmatpush1.bf16.msra.mxu0 %v198
    %228 = vmatprep.subr.bf16.mxu0 0
    %229 = vmatpush1.bf16.msra.mxu0 %v197
    %230 = vmatprep.subr.bf16.mxu0 0
    %231 = vmatpush1.bf16.msra.mxu0 %v196
    %232 = vmatprep.subr.bf16.mxu0 0
    %233 = vmatpush1.bf16.msra.mxu0 %v195
    %234 = vmatprep.subr.bf16.mxu0 0
    %235 = vmatpush1.bf16.msra.mxu0 %v194
    %236 = vmatprep.subr.bf16.mxu0 0
    %237 = vmatpush1.bf16.msra.mxu0 %v193
    %238 = vmatprep.subr.bf16.mxu0 0
    %239 = vmatpush1.bf16.msra.mxu0 %v192
    %240 = vmatprep.subr.bf16.mxu0 0
    %241 = vmatpush2.bf16.msra.mxu0 %v207
    %242 = vmatprep.subr.bf16.mxu0 0
    %243 = vmatpush2.bf16.msra.mxu0 %v206
    %244 = vmatprep.subr.bf16.mxu0 0
    %245 = vmatpush2.bf16.msra.mxu0 %v205
    %246 = vmatprep.subr.bf16.mxu0 0
    %247 = vmatpush2.bf16.msra.mxu0 %v204
    %248 = vmatprep.subr.bf16.mxu0 0
    %249 = vmatpush2.bf16.msra.mxu0 %v203
    %250 = vmatprep.subr.bf16.mxu0 0
    %251 = vmatpush2.bf16.msra.mxu0 %v202
    %252 = vmatprep.subr.bf16.mxu0 0
    %253 = vmatpush2.bf16.msra.mxu0 %v201
    %254 = vmatprep.subr.bf16.mxu0 0
    %255 = vmatpush2.bf16.msra.mxu0 %v200
    %256 = vmatprep.mubr.bf16.mxu0 %v125
    %257 = vmatmul.mubr.bf16.gmra.mxu0 %v124
    %v258 = vpop.f32.mrf.mxu0
    %v259 = vadd.f32 %v119, %v258
    %v260 = vpop.f32.mrf.mxu0
    %v261 = vpop.f32.mrf.mxu0
    %v262 = vpop.f32.mrf.mxu0
    %263 = vdwg.mxu0
    %v264 = vxor.u32 %v259, 2147483648
    %v265 = vmul.f32 %v264, 1.442695
    %v266 = vpow.pop %v265
    %v267 = vadd.f32 %v266, 1.0
    %v268 = vrcp.pop %v267
    %v269 = vmul.f32 1.0, %v268
    %v270 = vpack.c.bf16 %v269, %v269
    %v271 = vld [vmem:[#allocation7] sm:$0xf]
    %v272 = vld [vmem:[#allocation7 + $0x4] sm:$0xf]
    %v273 = vld [vmem:[#allocation7 + $0x8] sm:$0xf]
    %v274 = vld [vmem:[#allocation7 + $0xc] sm:$0xf]
    %v275 = vld [vmem:[#allocation7 + $0x10] sm:$0xf]
    %v276 = vld [vmem:[#allocation7 + $0x14] sm:$0xf]
    %v277 = vld [vmem:[#allocation7 + $0x18] sm:$0xf]
    %v278 = vld [vmem:[#allocation7 + $0x1c] sm:$0xf]
    %v279 = vld [vmem:[#allocation7 + $0x20] sm:$0xf]
    %v280 = vld [vmem:[#allocation7 + $0x24] sm:$0xf]
    %v281 = vld [vmem:[#allocation7 + $0x28] sm:$0xf]
    %v282 = vld [vmem:[#allocation7 + $0x2c] sm:$0xf]
    %v283 = vld [vmem:[#allocation7 + $0x30] sm:$0xf]
    %v284 = vld [vmem:[#allocation7 + $0x34] sm:$0xf]
    %v285 = vld [vmem:[#allocation7 + $0x38] sm:$0xf]
    %v286 = vld [vmem:[#allocation7 + $0x3c] sm:$0xf]
    %v287 = vld [vmem:[%s4] sm:$0x1]
    %v289 = vlaneseq
    %v290 = vshrl.u32 %v289, 7
    %v291 = vsub.s32 0, %v290
    %v292 = vrot.slane %v287, %v291
    %v310 = vunpack.c.l.b16 %v271
    %v311 = vunpack.c.l.b16 %v272
    %v312 = vunpack.c.l.b16 %v273
    %v313 = vunpack.c.l.b16 %v274
    %v314 = vunpack.c.l.b16 %v275
    %v315 = vunpack.c.l.b16 %v276
    %v316 = vunpack.c.l.b16 %v277
    %v317 = vunpack.c.l.b16 %v278
    %v318 = vunpack.c.l.b16 %v279
    %v319 = vunpack.c.l.b16 %v280
    %v320 = vunpack.c.l.b16 %v281
    %v321 = vunpack.c.l.b16 %v282
    %v322 = vunpack.c.l.b16 %v283
    %v323 = vunpack.c.l.b16 %v284
    %v324 = vunpack.c.l.b16 %v285
    %v325 = vunpack.c.l.b16 %v286
    %v326 = vpack.c.b16 %v311, %v310
    %v327 = vpack.c.b16 %v313, %v312
    %v328 = vpack.c.b16 %v315, %v314
    %v329 = vpack.c.b16 %v317, %v316
    %v330 = vpack.c.b16 %v319, %v318
    %v331 = vpack.c.b16 %v321, %v320
    %v332 = vpack.c.b16 %v323, %v322
    %v333 = vpack.c.b16 %v325, %v324
    %342 = vmatprep.subr.bf16.mxu0 0
    %343 = vmatpush1.bf16.msra.mxu0 %v333
    %344 = vmatprep.subr.bf16.mxu0 0
    %345 = vmatpush1.bf16.msra.mxu0 %v332
    %346 = vmatprep.subr.bf16.mxu0 0
    %347 = vmatpush1.bf16.msra.mxu0 %v331
    %348 = vmatprep.subr.bf16.mxu0 0
    %349 = vmatpush1.bf16.msra.mxu0 %v330
    %350 = vmatprep.subr.bf16.mxu0 0
    %351 = vmatpush1.bf16.msra.mxu0 %v329
    %352 = vmatprep.subr.bf16.mxu0 0
    %353 = vmatpush1.bf16.msra.mxu0 %v328
    %354 = vmatprep.subr.bf16.mxu0 0
    %355 = vmatpush1.bf16.msra.mxu0 %v327
    %356 = vmatprep.subr.bf16.mxu0 0
    %357 = vmatpush1.bf16.msra.mxu0 %v326
    %358 = vmatprep.subr.bf16.mxu0 0
    %359 = vmatpush2.bf16.msra.mxu0 0
    %360 = vmatprep.subr.bf16.mxu0 0
    %361 = vmatpush2.bf16.msra.mxu0 0
    %362 = vmatprep.subr.bf16.mxu0 0
    %363 = vmatpush2.bf16.msra.mxu0 0
    %364 = vmatprep.subr.bf16.mxu0 0
    %365 = vmatpush2.bf16.msra.mxu0 0
    %366 = vmatprep.subr.bf16.mxu0 0
    %367 = vmatpush2.bf16.msra.mxu0 0
    %368 = vmatprep.subr.bf16.mxu0 0
    %369 = vmatpush2.bf16.msra.mxu0 0
    %370 = vmatprep.subr.bf16.mxu0 0
    %371 = vmatpush2.bf16.msra.mxu0 0
    %372 = vmatprep.subr.bf16.mxu0 0
    %373 = vmatpush2.bf16.msra.mxu0 0
    %374 = vmatprep.mubr.bf16.mxu0 0
    %375 = vmatmul.mubr.bf16.gmra.mxu0 %v270
    %v376 = vpop.f32.mrf.mxu0
    %v377 = vadd.f32 %v292, %v376
    %v378 = vpop.f32.mrf.mxu0
    %v379 = vpop.f32.mrf.mxu0
    %v380 = vpop.f32.mrf.mxu0
    %381 = vdwg.mxu0
    %v382 = vxor.u32 %v377, 2147483648
    %v383 = vmul.f32 %v382, 1.442695
    %v384 = vpow.pop %v383
    %v385 = vadd.f32 %v384, 1.0
    %v386 = vrcp.pop %v385
    %v387 = vmul.f32 1.0, %v386
    %v388 = vpack.c.bf16 %v387, %v387
    %v389 = vld [vmem:[#allocation8] sm:$0xf]
    %v390 = vld [vmem:[#allocation8 + $0x4] sm:$0xf]
    %v391 = vld [vmem:[#allocation8 + $0x8] sm:$0xf]
    %v392 = vld [vmem:[#allocation8 + $0xc] sm:$0xf]
    %v393 = vld [vmem:[#allocation8 + $0x10] sm:$0xf]
    %v394 = vld [vmem:[#allocation8 + $0x14] sm:$0xf]
    %v395 = vld [vmem:[#allocation8 + $0x18] sm:$0xf]
    %v396 = vld [vmem:[#allocation8 + $0x1c] sm:$0xf]
    %v397 = vld [vmem:[#allocation8 + $0x20] sm:$0xf]
    %v398 = vld [vmem:[#allocation8 + $0x24] sm:$0xf]
    %v399 = vld [vmem:[#allocation8 + $0x28] sm:$0xf]
    %v400 = vld [vmem:[#allocation8 + $0x2c] sm:$0xf]
    %v401 = vld [vmem:[#allocation8 + $0x30] sm:$0xf]
    %v402 = vld [vmem:[#allocation8 + $0x34] sm:$0xf]
    %v403 = vld [vmem:[#allocation8 + $0x38] sm:$0xf]
    %v404 = vld [vmem:[#allocation8 + $0x3c] sm:$0xf]
    %v405 = vld [vmem:[%s6] sm:$0x1]
    %v407 = vlaneseq
    %v408 = vshrl.u32 %v407, 7
    %v409 = vsub.s32 0, %v408
    %v410 = vrot.slane %v405, %v409
    %v428 = vunpack.c.l.b16 %v389
    %v429 = vunpack.c.l.b16 %v390
    %v430 = vunpack.c.l.b16 %v391
    %v431 = vunpack.c.l.b16 %v392
    %v432 = vunpack.c.l.b16 %v393
    %v433 = vunpack.c.l.b16 %v394
    %v434 = vunpack.c.l.b16 %v395
    %v435 = vunpack.c.l.b16 %v396
    %v436 = vunpack.c.l.b16 %v397
    %v437 = vunpack.c.l.b16 %v398
    %v438 = vunpack.c.l.b16 %v399
    %v439 = vunpack.c.l.b16 %v400
    %v440 = vunpack.c.l.b16 %v401
    %v441 = vunpack.c.l.b16 %v402
    %v442 = vunpack.c.l.b16 %v403
    %v443 = vunpack.c.l.b16 %v404
    %v444 = vpack.c.b16 %v429, %v428
    %v445 = vpack.c.b16 %v431, %v430
    %v446 = vpack.c.b16 %v433, %v432
    %v447 = vpack.c.b16 %v435, %v434
    %v448 = vpack.c.b16 %v437, %v436
    %v449 = vpack.c.b16 %v439, %v438
    %v450 = vpack.c.b16 %v441, %v440
    %v451 = vpack.c.b16 %v443, %v442
    %460 = vmatprep.subr.bf16.mxu0 0
    %461 = vmatpush1.bf16.msra.mxu0 %v451
    %462 = vmatprep.subr.bf16.mxu0 0
    %463 = vmatpush1.bf16.msra.mxu0 %v450
    %464 = vmatprep.subr.bf16.mxu0 0
    %465 = vmatpush1.bf16.msra.mxu0 %v449
    %466 = vmatprep.subr.bf16.mxu0 0
    %467 = vmatpush1.bf16.msra.mxu0 %v448
    %468 = vmatprep.subr.bf16.mxu0 0
    %469 = vmatpush1.bf16.msra.mxu0 %v447
    %470 = vmatprep.subr.bf16.mxu0 0
    %471 = vmatpush1.bf16.msra.mxu0 %v446
    %472 = vmatprep.subr.bf16.mxu0 0
    %473 = vmatpush1.bf16.msra.mxu0 %v445
    %474 = vmatprep.subr.bf16.mxu0 0
    %475 = vmatpush1.bf16.msra.mxu0 %v444
    %476 = vmatprep.subr.bf16.mxu0 0
    %477 = vmatpush2.bf16.msra.mxu0 0
    %478 = vmatprep.subr.bf16.mxu0 0
    %479 = vmatpush2.bf16.msra.mxu0 0
    %480 = vmatprep.subr.bf16.mxu0 0
    %481 = vmatpush2.bf16.msra.mxu0 0
    %482 = vmatprep.subr.bf16.mxu0 0
    %483 = vmatpush2.bf16.msra.mxu0 0
    %484 = vmatprep.subr.bf16.mxu0 0
    %485 = vmatpush2.bf16.msra.mxu0 0
    %486 = vmatprep.subr.bf16.mxu0 0
    %487 = vmatpush2.bf16.msra.mxu0 0
    %488 = vmatprep.subr.bf16.mxu0 0
    %489 = vmatpush2.bf16.msra.mxu0 0
    %490 = vmatprep.subr.bf16.mxu0 0
    %491 = vmatpush2.bf16.msra.mxu0 0
    %492 = vmatprep.mubr.bf16.mxu0 0
    %493 = vmatmul.mubr.bf16.gmra.mxu0 %v388
    %v494 = vpop.f32.mrf.mxu0
    %v495 = vadd.f32 %v410, %v494
    %v496 = vpop.f32.mrf.mxu0
    %v497 = vpop.f32.mrf.mxu0
    %v498 = vpop.f32.mrf.mxu0
    %499 = vdwg.mxu0
    %500 = vst [vmem:[#allocation10] sm:$0xff] %v495
    // Predicated region
    $region46: #{tpu_custom_call.1} parent=1 // pred_check
      _
    $region47: #{tpu_custom_call.1} parent=1 // pred_check_branch
      %502 = sbr.rel (0) target = $region49
    $region48: #{tpu_custom_call.1} parent=1 // pred_region
      %s504 = ssub.s32 128, 128
      %505 = vsyncadd [#allocation4], %s504
      %s507 = sshll.u32 [#allocation10], 4
      %s508 = int_to_ptr.vmem [resolvable:$true] %s507
      %510 = dma.vmem_to_hbm [thread:$0]  %s508, 128, %s7, [#allocation4]
    $region49: #{tpu_custom_call.1} parent=1 // pred_fallthru
      _
    // Predicated region
    $region50: #{tpu_custom_call.1} parent=1 // pred_check
      _
    $region51: #{tpu_custom_call.1} parent=1 // pred_check_branch
      %512 = sbr.rel (0) target = $region53
    $region52: #{tpu_custom_call.1} parent=1 // pred_region
      %513 = dma.done [#allocation4], 128
    $region53: #{tpu_custom_call.1} parent=1 // pred_fallthru
      _
    %514 = vsyncpa [#allocation3], 1
    %515 = vsyncpa [#allocation6], 1
    %516 = vsyncpa [#allocation9], 1
    %517 = vsyncpa [#allocation4], 1

</llo_original>
